<compile_context>
chip_gen: v5e
topology: v5e:2x2
jax: 0.10.0
libtpu: 0.0.40
codegen_flags: <defaults>
</compile_context>

<pallas_src>
import jax
import jax.numpy as jnp
import numpy as np
from jax import lax
from jax.experimental import pallas as pl
from jax.experimental.pallas import tpu as pltpu


def _reverse_last_axis(x):
    """Reverse the (power-of-two length) last axis using XLU rotates only.

    reverse(x)[i] = x[L-1-i] = x[i XOR (L-1)], realized as log2(L) pairwise
    block-swap stages (i -> i XOR b for b = 1, 2, ..., L/2).  Each stage takes
    two opposite full rotates of the data; a rotated lane-index vector tells
    which of the two holds the wanted element, so correctness does not depend
    on the rotate sign convention.
    """
    L = x.shape[-1]
    assert L >= 2 and (L & (L - 1)) == 0, "power-of-two length required"
    axis = x.ndim - 1
    lane = lax.broadcasted_iota(jnp.int32, x.shape, axis)
    b = 1
    while b < L:
        tgt = lane ^ b                                   # source index we need
        a_val = pltpu.roll(x, shift=b, axis=axis)
        a_src = pltpu.roll(lane, shift=b, axis=axis)     # where a_val came from
        b_val = pltpu.roll(x, shift=L - b, axis=axis)
        x = jnp.where(a_src == tgt, a_val, b_val)
        b *= 2
    return x


def _flip_kernel(x_ref, o_ref):
    # (Rb, L) block, native dtype. Reversing each length-L row == flip over (H, W).
    o_ref[...] = _reverse_last_axis(x_ref[...])


def _pick_block_rows(num_rows, row_elems, itemsize, budget_bytes=4 * 1024 * 1024):
    """Largest row-block that divides num_rows, is a multiple of 8 (or the full
    extent), and keeps in+out double buffers within a conservative VMEM budget
    (sized so it also fits v7x's smaller 64 MiB VMEM)."""
    max_rows = max(1, budget_bytes // (row_elems * itemsize))
    if max_rows >= num_rows:
        return num_rows
    rows = (max_rows // 8) * 8
    while rows >= 8:
        if num_rows % rows == 0:
            return rows
        rows -= 8
    return num_rows  # no suitable divisor: take the whole array as one block


def _flip_hw_pallas(img):
    """flip(img, (2, 3)) for NCHW input via a lane-dense Pallas reverse."""
    N, C, H, W = img.shape
    M, L = N * C, H * W
    x2 = img.reshape(M, L)  # free view of contiguous NCHW
    rb = _pick_block_rows(M, L, jnp.dtype(img.dtype).itemsize)
    grid = (M // rb,)
    out = pl.pallas_call(
        _flip_kernel,
        out_shape=jax.ShapeDtypeStruct((M, L), img.dtype),
        grid=grid,
        in_specs=[pl.BlockSpec((rb, L), lambda i: (i, 0))],
        out_specs=pl.BlockSpec((rb, L), lambda i: (i, 0)),
        compiler_params=pltpu.CompilerParams(
            dimension_semantics=("parallel",)),
    )(x2)
    return out.reshape(N, C, H, W)


def random_horizontal_flip(img, key, p=0.5):
    """img: (N, C, H, W).  With probability p return flip(img, (2, 3)), else img."""
    N, C, H, W = img.shape
    L = H * W
    do_flip = jax.random.uniform(key, ()) < p  # equivalent of torch.rand(1) < p
    if L >= 128 and (L & (L - 1)) == 0:
        flip_fn = _flip_hw_pallas
    else:
        # TODO(synk): non power-of-two H*W needs a gather-based in-kernel
        # reverse; fall back to the XLA flip for those shapes.
        flip_fn = lambda x: jnp.flip(x, (2, 3))
    # Gate outside the kernel: the no-flip path skips the HBM pass entirely.
    return lax.cond(do_flip, flip_fn, lambda x: x, img)


if __name__ == "__main__":
    key = jax.random.PRNGKey(0)
    k_img, k_flip = jax.random.split(key)

    N, C, H, W = 2, 4, 16, 16
    x = jax.random.normal(k_img, (N, C, H, W), dtype=jnp.float32)
    p = 0.5

    # 1) Direct check of the Pallas flip path (independent of the random draw).
    flipped = jax.block_until_ready(jax.jit(_flip_hw_pallas)(x))
    np.testing.assert_array_equal(np.asarray(flipped),
                                  np.asarray(jnp.flip(x, (2, 3))))

    # 2) Full module semantics with the random gate.
    fn = jax.jit(lambda img, k: random_horizontal_flip(img, k, p=p))
    out = jax.block_until_ready(fn(x, k_flip))

    do_flip = bool(jax.random.uniform(k_flip, ()) < p)
    ref = jnp.flip(x, (2, 3)) if do_flip else x
    np.testing.assert_array_equal(np.asarray(out), np.asarray(ref))

    print("KERNEL_OK")
</pallas_src>

<mosaic_0001>
module attributes {stable_mosaic.version = 11 : i64} {
  func.func @_flip_kernel(%arg0: i32, %arg1: memref<8x256xf32, #tpu.memory_space<vmem>>, %arg2: memref<8x256xf32, #tpu.memory_space<vmem>>) attributes {dimension_semantics = [#tpu.dimension_semantics<parallel>], iteration_bounds = array<i64: 1>, scalar_prefetch = 0 : i64, scratch_operands = 0 : i64, tpu.core_type = #tpu.core_type<tc>, window_params = [{transform_indices = @transform_0, window_bounds = array<i64: 8, 256>}, {transform_indices = @transform_1, window_bounds = array<i64: 8, 256>}]} {
    %c0 = arith.constant 0 : index
    %c0_0 = arith.constant 0 : index
    %0 = vector.load %arg1[%c0, %c0_0] : memref<8x256xf32, #tpu.memory_space<vmem>>, vector<8x256xf32>
    %1 = tpu.iota {dimensions = array<i32: 1>} : vector<8x256xi32>
    %c1_i32 = arith.constant 1 : i32
    %2 = vector.broadcast %c1_i32 : i32 to vector<8x256xi32>
    %3 = arith.xori %1, %2 : vector<8x256xi32>
    %c1_i32_1 = arith.constant 1 : i32
    %4 = tpu.dynamic_rotate %0 by %c1_i32_1 dim 1 : vector<8x256xf32>, i32 -> vector<8x256xf32>
    %c1_i32_2 = arith.constant 1 : i32
    %5 = tpu.dynamic_rotate %1 by %c1_i32_2 dim 1 : vector<8x256xi32>, i32 -> vector<8x256xi32>
    %c255_i32 = arith.constant 255 : i32
    %6 = tpu.dynamic_rotate %0 by %c255_i32 dim 1 : vector<8x256xf32>, i32 -> vector<8x256xf32>
    %7 = arith.cmpi eq, %5, %3 : vector<8x256xi32>
    %8 = arith.select %7, %4, %6 : vector<8x256xi1>, vector<8x256xf32>
    %c2_i32 = arith.constant 2 : i32
    %9 = vector.broadcast %c2_i32 : i32 to vector<8x256xi32>
    %10 = arith.xori %1, %9 : vector<8x256xi32>
    %c2_i32_3 = arith.constant 2 : i32
    %11 = tpu.dynamic_rotate %8 by %c2_i32_3 dim 1 : vector<8x256xf32>, i32 -> vector<8x256xf32>
    %c2_i32_4 = arith.constant 2 : i32
    %12 = tpu.dynamic_rotate %1 by %c2_i32_4 dim 1 : vector<8x256xi32>, i32 -> vector<8x256xi32>
    %c254_i32 = arith.constant 254 : i32
    %13 = tpu.dynamic_rotate %8 by %c254_i32 dim 1 : vector<8x256xf32>, i32 -> vector<8x256xf32>
    %14 = arith.cmpi eq, %12, %10 : vector<8x256xi32>
    %15 = arith.select %14, %11, %13 : vector<8x256xi1>, vector<8x256xf32>
    %c4_i32 = arith.constant 4 : i32
    %16 = vector.broadcast %c4_i32 : i32 to vector<8x256xi32>
    %17 = arith.xori %1, %16 : vector<8x256xi32>
    %c4_i32_5 = arith.constant 4 : i32
    %18 = tpu.dynamic_rotate %15 by %c4_i32_5 dim 1 : vector<8x256xf32>, i32 -> vector<8x256xf32>
    %c4_i32_6 = arith.constant 4 : i32
    %19 = tpu.dynamic_rotate %1 by %c4_i32_6 dim 1 : vector<8x256xi32>, i32 -> vector<8x256xi32>
    %c252_i32 = arith.constant 252 : i32
    %20 = tpu.dynamic_rotate %15 by %c252_i32 dim 1 : vector<8x256xf32>, i32 -> vector<8x256xf32>
    %21 = arith.cmpi eq, %19, %17 : vector<8x256xi32>
    %22 = arith.select %21, %18, %20 : vector<8x256xi1>, vector<8x256xf32>
    %c8_i32 = arith.constant 8 : i32
    %23 = vector.broadcast %c8_i32 : i32 to vector<8x256xi32>
    %24 = arith.xori %1, %23 : vector<8x256xi32>
    %c8_i32_7 = arith.constant 8 : i32
    %25 = tpu.dynamic_rotate %22 by %c8_i32_7 dim 1 : vector<8x256xf32>, i32 -> vector<8x256xf32>
    %c8_i32_8 = arith.constant 8 : i32
    %26 = tpu.dynamic_rotate %1 by %c8_i32_8 dim 1 : vector<8x256xi32>, i32 -> vector<8x256xi32>
    %c248_i32 = arith.constant 248 : i32
    %27 = tpu.dynamic_rotate %22 by %c248_i32 dim 1 : vector<8x256xf32>, i32 -> vector<8x256xf32>
    %28 = arith.cmpi eq, %26, %24 : vector<8x256xi32>
    %29 = arith.select %28, %25, %27 : vector<8x256xi1>, vector<8x256xf32>
    %c16_i32 = arith.constant 16 : i32
    %30 = vector.broadcast %c16_i32 : i32 to vector<8x256xi32>
    %31 = arith.xori %1, %30 : vector<8x256xi32>
    %c16_i32_9 = arith.constant 16 : i32
    %32 = tpu.dynamic_rotate %29 by %c16_i32_9 dim 1 : vector<8x256xf32>, i32 -> vector<8x256xf32>
    %c16_i32_10 = arith.constant 16 : i32
    %33 = tpu.dynamic_rotate %1 by %c16_i32_10 dim 1 : vector<8x256xi32>, i32 -> vector<8x256xi32>
    %c240_i32 = arith.constant 240 : i32
    %34 = tpu.dynamic_rotate %29 by %c240_i32 dim 1 : vector<8x256xf32>, i32 -> vector<8x256xf32>
    %35 = arith.cmpi eq, %33, %31 : vector<8x256xi32>
    %36 = arith.select %35, %32, %34 : vector<8x256xi1>, vector<8x256xf32>
    %c32_i32 = arith.constant 32 : i32
    %37 = vector.broadcast %c32_i32 : i32 to vector<8x256xi32>
    %38 = arith.xori %1, %37 : vector<8x256xi32>
    %c32_i32_11 = arith.constant 32 : i32
    %39 = tpu.dynamic_rotate %36 by %c32_i32_11 dim 1 : vector<8x256xf32>, i32 -> vector<8x256xf32>
    %c32_i32_12 = arith.constant 32 : i32
    %40 = tpu.dynamic_rotate %1 by %c32_i32_12 dim 1 : vector<8x256xi32>, i32 -> vector<8x256xi32>
    %c224_i32 = arith.constant 224 : i32
    %41 = tpu.dynamic_rotate %36 by %c224_i32 dim 1 : vector<8x256xf32>, i32 -> vector<8x256xf32>
    %42 = arith.cmpi eq, %40, %38 : vector<8x256xi32>
    %43 = arith.select %42, %39, %41 : vector<8x256xi1>, vector<8x256xf32>
    %c64_i32 = arith.constant 64 : i32
    %44 = vector.broadcast %c64_i32 : i32 to vector<8x256xi32>
    %45 = arith.xori %1, %44 : vector<8x256xi32>
    %c64_i32_13 = arith.constant 64 : i32
    %46 = tpu.dynamic_rotate %43 by %c64_i32_13 dim 1 : vector<8x256xf32>, i32 -> vector<8x256xf32>
    %c64_i32_14 = arith.constant 64 : i32
    %47 = tpu.dynamic_rotate %1 by %c64_i32_14 dim 1 : vector<8x256xi32>, i32 -> vector<8x256xi32>
    %c192_i32 = arith.constant 192 : i32
    %48 = tpu.dynamic_rotate %43 by %c192_i32 dim 1 : vector<8x256xf32>, i32 -> vector<8x256xf32>
    %49 = arith.cmpi eq, %47, %45 : vector<8x256xi32>
    %50 = arith.select %49, %46, %48 : vector<8x256xi1>, vector<8x256xf32>
    %c128_i32 = arith.constant 128 : i32
    %51 = vector.broadcast %c128_i32 : i32 to vector<8x256xi32>
    %52 = arith.xori %1, %51 : vector<8x256xi32>
    %c128_i32_15 = arith.constant 128 : i32
    %53 = tpu.dynamic_rotate %50 by %c128_i32_15 dim 1 : vector<8x256xf32>, i32 -> vector<8x256xf32>
    %c128_i32_16 = arith.constant 128 : i32
    %54 = tpu.dynamic_rotate %1 by %c128_i32_16 dim 1 : vector<8x256xi32>, i32 -> vector<8x256xi32>
    %c128_i32_17 = arith.constant 128 : i32
    %55 = tpu.dynamic_rotate %50 by %c128_i32_17 dim 1 : vector<8x256xf32>, i32 -> vector<8x256xf32>
    %56 = arith.cmpi eq, %54, %52 : vector<8x256xi32>
    %57 = arith.select %56, %53, %55 : vector<8x256xi1>, vector<8x256xf32>
    %c0_18 = arith.constant 0 : index
    %c0_19 = arith.constant 0 : index
    %58 = vector.load %arg2[%c0_18, %c0_19] : memref<8x256xf32, #tpu.memory_space<vmem>>, vector<8x256xf32>
    tpu.vector_store %arg2[%c0_18, %c0_19], %57 {strides = array<i32>} : memref<8x256xf32, #tpu.memory_space<vmem>>, vector<8x256xf32>,
    return
  }
  func.func @transform_0(%arg0: i32) -> (i32, i32) {
    %c0_i32 = arith.constant 0 : i32
    %c0_i32_0 = arith.constant 0 : i32
    return %arg0, %c0_i32 : i32, i32
  }
  func.func @transform_1(%arg0: i32) -> (i32, i32) {
    %c0_i32 = arith.constant 0 : i32
    %c0_i32_0 = arith.constant 0 : i32
    return %arg0, %c0_i32 : i32, i32
  }
}

</mosaic_0001>

<llo_original>
// kernel: _flip_hw_pallas.1
$region0: #{_flip_hw_pallas.1}
  #allocation0 [shape = 'u32[]', space=smem, size = 0x4, offset = 0x4, fixed_abs, tag = 'smem constant byte address 0x4 - core index']
  #allocation1 [shape = 'u32[72,128]{1,0:T(1,128)}', space=vmem, size = 0x9000, scoped, tag = 'internal scratch']
  %s0 = inlined_call_operand.vmem [shape: f32[8,256], index: 0, kind: input, shape index: {}]
  %s1 = inlined_call_operand.vmem [shape: f32[8,256], index: 1, kind: output, shape index: {}]
  %s2 = sld [smem:[#allocation0]]
  $region14: #{_flip_hw_pallas.1} parent=0
    _
  %s4 = ssub.s32 1, %s2
  %s5 = scalar_select 0, %s4, %s2
  // Predicated region
  $region2: #{_flip_hw_pallas.1} parent=0 // pred_check
    _
  $region3: #{_flip_hw_pallas.1} parent=0 // pred_check_branch
    %7 = sbr.rel (0) target = $region5
  $region4: #{_flip_hw_pallas.1} parent=0 // pred_region
    _
  $region5: #{_flip_hw_pallas.1} parent=0 // pred_fallthru
    _
  %v8 = vld [vmem:[%s0] sm:$0xff]
  %v9 = vld [vmem:[%s0 + $0x8] sm:$0xff]
  %v10 = vlaneseq
  %v11 = vand.u32 %v10, 127
  %v12 = vadd.s32 %v11, 128
  %v13 = vxor.u32 %v11, 1
  %v14 = vxor.u32 %v12, 1
  %15 = vrot.lane.b32.xlu0 %v8, 1
  %v16 = vpop.permute.xlu0 %15
  %17 = vrot.lane.b32.xlu0 %v9, 1
  %v18 = vpop.permute.xlu0 %17
  %vm19 = vcmp.lt.s32.totalorder %v11, 1
  %v20 = vsel %vm19, %v16, %v18
  %v21 = vsel %vm19, %v18, %v16
  %22 = vrot.lane.b32.xlu0 %v11, 1
  %v23 = vpop.permute.xlu0 %22
  %24 = vrot.lane.b32.xlu0 %v12, 1
  %v25 = vpop.permute.xlu0 %24
  %v26 = vsel %vm19, %v23, %v25
  %v27 = vsel %vm19, %v25, %v23
  %28 = vrot.lane.b32.xlu0 %v8, 127
  %v29 = vpop.permute.xlu0 %28
  %30 = vrot.lane.b32.xlu0 %v9, 127
  %v31 = vpop.permute.xlu0 %30
  %vm32 = vcmp.lt.s32.totalorder %v11, 127
  %v33 = vsel %vm32, %v29, %v31
  %v34 = vsel %vm32, %v31, %v29
  %vm35 = vcmp.eq.s32.totalorder %v27, %v13
  %vm36 = vcmp.eq.s32.totalorder %v26, %v14
  %v37 = vsel %vm35, %v21, %v33
  %v38 = vsel %vm36, %v20, %v34
  %v39 = vxor.u32 %v11, 2
  %v40 = vxor.u32 %v12, 2
  %41 = vrot.lane.b32.xlu0 %v37, 2
  %v42 = vpop.permute.xlu0 %41
  %43 = vrot.lane.b32.xlu0 %v38, 2
  %v44 = vpop.permute.xlu0 %43
  %vm45 = vcmp.lt.s32.totalorder %v11, 2
  %v46 = vsel %vm45, %v42, %v44
  %v47 = vsel %vm45, %v44, %v42
  %48 = vrot.lane.b32.xlu0 %v11, 2
  %v49 = vpop.permute.xlu0 %48
  %50 = vrot.lane.b32.xlu0 %v12, 2
  %v51 = vpop.permute.xlu0 %50
  %v52 = vsel %vm45, %v49, %v51
  %v53 = vsel %vm45, %v51, %v49
  %54 = vrot.lane.b32.xlu0 %v37, 126
  %v55 = vpop.permute.xlu0 %54
  %56 = vrot.lane.b32.xlu0 %v38, 126
  %v57 = vpop.permute.xlu0 %56
  %vm58 = vcmp.lt.s32.totalorder %v11, 126
  %v59 = vsel %vm58, %v55, %v57
  %v60 = vsel %vm58, %v57, %v55
  %vm61 = vcmp.eq.s32.totalorder %v53, %v39
  %vm62 = vcmp.eq.s32.totalorder %v52, %v40
  %v63 = vsel %vm61, %v47, %v59
  %v64 = vsel %vm62, %v46, %v60
  %v65 = vxor.u32 %v11, 4
  %v66 = vxor.u32 %v12, 4
  %67 = vrot.lane.b32.xlu0 %v63, 4
  %v68 = vpop.permute.xlu0 %67
  %69 = vrot.lane.b32.xlu0 %v64, 4
  %v70 = vpop.permute.xlu0 %69
  %vm71 = vcmp.lt.s32.totalorder %v11, 4
  %v72 = vsel %vm71, %v68, %v70
  %v73 = vsel %vm71, %v70, %v68
  %74 = vrot.lane.b32.xlu0 %v11, 4
  %v75 = vpop.permute.xlu0 %74
  %76 = vrot.lane.b32.xlu0 %v12, 4
  %v77 = vpop.permute.xlu0 %76
  %v78 = vsel %vm71, %v75, %v77
  %v79 = vsel %vm71, %v77, %v75
  %80 = vrot.lane.b32.xlu0 %v63, 124
  %v81 = vpop.permute.xlu0 %80
  %82 = vrot.lane.b32.xlu0 %v64, 124
  %v83 = vpop.permute.xlu0 %82
  %vm84 = vcmp.lt.s32.totalorder %v11, 124
  %v85 = vsel %vm84, %v81, %v83
  %v86 = vsel %vm84, %v83, %v81
  %vm87 = vcmp.eq.s32.totalorder %v79, %v65
  %vm88 = vcmp.eq.s32.totalorder %v78, %v66
  %v89 = vsel %vm87, %v73, %v85
  %v90 = vsel %vm88, %v72, %v86
  %v91 = vxor.u32 %v11, 8
  %v92 = vxor.u32 %v12, 8
  %93 = vrot.lane.b32.xlu0 %v89, 8
  %v94 = vpop.permute.xlu0 %93
  %95 = vrot.lane.b32.xlu0 %v90, 8
  %v96 = vpop.permute.xlu0 %95
  %vm97 = vcmp.lt.s32.totalorder %v11, 8
  %v98 = vsel %vm97, %v94, %v96
  %v99 = vsel %vm97, %v96, %v94
  %100 = vrot.lane.b32.xlu0 %v11, 8
  %v101 = vpop.permute.xlu0 %100
  %102 = vrot.lane.b32.xlu0 %v12, 8
  %v103 = vpop.permute.xlu0 %102
  %v104 = vsel %vm97, %v101, %v103
  %v105 = vsel %vm97, %v103, %v101
  %106 = vrot.lane.b32.xlu0 %v89, 120
  %v107 = vpop.permute.xlu0 %106
  %108 = vrot.lane.b32.xlu0 %v90, 120
  %v109 = vpop.permute.xlu0 %108
  %vm110 = vcmp.lt.s32.totalorder %v11, 120
  %v111 = vsel %vm110, %v107, %v109
  %v112 = vsel %vm110, %v109, %v107
  %vm113 = vcmp.eq.s32.totalorder %v105, %v91
  %vm114 = vcmp.eq.s32.totalorder %v104, %v92
  %v115 = vsel %vm113, %v99, %v111
  %v116 = vsel %vm114, %v98, %v112
  %v117 = vxor.u32 %v11, 16
  %v118 = vxor.u32 %v12, 16
  %119 = vrot.lane.b32.xlu0 %v115, 16
  %v120 = vpop.permute.xlu0 %119
  %121 = vrot.lane.b32.xlu0 %v116, 16
  %v122 = vpop.permute.xlu0 %121
  %vm123 = vcmp.lt.s32.totalorder %v11, 16
  %v124 = vsel %vm123, %v120, %v122
  %v125 = vsel %vm123, %v122, %v120
  %126 = vrot.lane.b32.xlu0 %v11, 16
  %v127 = vpop.permute.xlu0 %126
  %128 = vrot.lane.b32.xlu0 %v12, 16
  %v129 = vpop.permute.xlu0 %128
  %v130 = vsel %vm123, %v127, %v129
  %v131 = vsel %vm123, %v129, %v127
  %132 = vrot.lane.b32.xlu0 %v115, 112
  %v133 = vpop.permute.xlu0 %132
  %134 = vrot.lane.b32.xlu0 %v116, 112
  %v135 = vpop.permute.xlu0 %134
  %vm136 = vcmp.lt.s32.totalorder %v11, 112
  %v137 = vsel %vm136, %v133, %v135
  %v138 = vsel %vm136, %v135, %v133
  %vm139 = vcmp.eq.s32.totalorder %v131, %v117
  %vm140 = vcmp.eq.s32.totalorder %v130, %v118
  %v141 = vsel %vm139, %v125, %v137
  %v142 = vsel %vm140, %v124, %v138
  %v143 = vxor.u32 %v11, 32
  %v144 = vxor.u32 %v12, 32
  %145 = vrot.lane.b32.xlu0 %v141, 32
  %v146 = vpop.permute.xlu0 %145
  %147 = vrot.lane.b32.xlu0 %v142, 32
  %v148 = vpop.permute.xlu0 %147
  %vm149 = vcmp.lt.s32.totalorder %v11, 32
  %v150 = vsel %vm149, %v146, %v148
  %v151 = vsel %vm149, %v148, %v146
  %152 = vrot.lane.b32.xlu0 %v11, 32
  %v153 = vpop.permute.xlu0 %152
  %154 = vrot.lane.b32.xlu0 %v12, 32
  %v155 = vpop.permute.xlu0 %154
  %v156 = vsel %vm149, %v153, %v155
  %v157 = vsel %vm149, %v155, %v153
  %158 = vrot.lane.b32.xlu0 %v141, 96
  %v159 = vpop.permute.xlu0 %158
  %160 = vrot.lane.b32.xlu0 %v142, 96
  %v161 = vpop.permute.xlu0 %160
  %vm162 = vcmp.lt.s32.totalorder %v11, 96
  %v163 = vsel %vm162, %v159, %v161
  %v164 = vsel %vm162, %v161, %v159
  %vm165 = vcmp.eq.s32.totalorder %v157, %v143
  %vm166 = vcmp.eq.s32.totalorder %v156, %v144
  %v167 = vsel %vm165, %v151, %v163
  %v168 = vsel %vm166, %v150, %v164
  %v169 = vxor.u32 %v11, 64
  %v170 = vxor.u32 %v12, 64
  %171 = vrot.lane.b32.xlu0 %v167, 64
  %v172 = vpop.permute.xlu0 %171
  %173 = vrot.lane.b32.xlu0 %v168, 64
  %v174 = vpop.permute.xlu0 %173
  %vm175 = vcmp.lt.s32.totalorder %v11, 64
  %v176 = vsel %vm175, %v172, %v174
  %v177 = vsel %vm175, %v174, %v172
  %178 = vrot.lane.b32.xlu0 %v11, 64
  %v179 = vpop.permute.xlu0 %178
  %180 = vrot.lane.b32.xlu0 %v12, 64
  %v181 = vpop.permute.xlu0 %180
  %v182 = vsel %vm175, %v179, %v181
  %v183 = vsel %vm175, %v181, %v179
  %vm184 = vcmp.eq.s32.totalorder %v183, %v169
  %vm185 = vcmp.eq.s32.totalorder %v182, %v170
  %v186 = vsel %vm184, %v177, %v176
  %v187 = vsel %vm185, %v176, %v177
  %188 = vst [vmem:[%s1] sm:$0xff] %v187
  %189 = vst [vmem:[%s1 + $0x8] sm:$0xff] %v186
  // Predicated region
  $region6: #{_flip_hw_pallas.1} parent=0 // pred_check
    _
  $region7: #{_flip_hw_pallas.1} parent=0 // pred_check_branch
    %191 = sbr.rel (0) target = $region9
  $region8: #{_flip_hw_pallas.1} parent=0 // pred_region
    _
  $region9: #{_flip_hw_pallas.1} parent=0 // pred_fallthru
    _
  // Predicated region
  $region10: #{_flip_hw_pallas.1} parent=0 // pred_check
    _
  $region11: #{_flip_hw_pallas.1} parent=0 // pred_check_branch
    %193 = sbr.rel (0) target = $region13
  $region12: #{_flip_hw_pallas.1} parent=0 // pred_region
    _
  $region13: #{_flip_hw_pallas.1} parent=0 // pred_fallthru
    _

</llo_original>
